<compile_context>
chip_gen: v7x
topology: tpu7x:2x2x1
jax: 0.10.0
libtpu: 0.0.40
codegen_flags: <defaults>
</compile_context>

<pallas_src>
import jax
import jax.numpy as jnp
from jax.experimental import pallas as pl
from jax.experimental.pallas import tpu as pltpu

_SEG = 128  # width of each triangular MXU matmul (lane-tile aligned)


def _round_up(x: int, m: int) -> int:
    return ((x + m - 1) // m) * m


def _pick_tl(L: int) -> int:
    """Lane tile: multiple of 128 minimizing last-block waste (prefer larger)."""
    candidates = (512, 384, 256, 128)
    return min(candidates, key=lambda t: (pl.cdiv(L, t) * t - L, -t))


def _masked_cumsum2_kernel(lens_ref, tri_ref, t_ref, e_ref,
                           ot_ref, oe_ref, tcar_ref, ecar_ref):
    """Blocked masked cumsum along lanes for two channels sharing one mask.

    lens_ref : (TR, 1)    int32  valid length per row
    tri_ref  : (SEG, SEG) f32    upper-triangular ones (resident constant)
    t_ref    : (TR, TL)   f32    times block
    e_ref    : (TR, TL)   f32    embeddings[..., 1] block
    ot_ref   : (TR, TL)   f32    cumsum(times * mask) block
    oe_ref   : (TR, TL)   f32    cumsum(emb1  * mask) block
    tcar_ref : (TR, 1)    f32    running prefix for the times channel
    ecar_ref : (TR, 1)    f32    running prefix for the emb channel
    """
    tr, tl = t_ref.shape
    seg = tri_ref.shape[0]
    n_seg = tl // seg
    lb = pl.program_id(1)  # L-block index (reduction axis, last in grid)

    @pl.when(lb == 0)
    def _init():
        tcar_ref[...] = jnp.zeros_like(tcar_ref)
        ecar_ref[...] = jnp.zeros_like(ecar_ref)

    # Padding mask rebuilt in-kernel: (1, tl) lane iota + (tr, 1) lens column.
    # jnp.where (select, not multiply) keeps garbage lanes of partial edge
    # blocks NaN-safe.
    pos = lb * tl + jax.lax.broadcasted_iota(jnp.int32, (1, tl), 1)
    mask = pos < lens_ref[...]                           # (tr, tl) via broadcast

    tri = tri_ref[...]

    def channel_scan(x_ref, o_ref, car_ref):
        xm = jnp.where(mask, x_ref[...], 0.0)
        run = car_ref[...]                               # (tr, 1) running prefix
        for s in range(n_seg):                           # static, n_seg <= 4
            lo = s * seg
            xs = xm[:, lo:lo + seg]                      # lane-tile aligned slice
            cs = jnp.dot(xs, tri,
                         preferred_element_type=jnp.float32,
                         precision=jax.lax.Precision.HIGHEST)
            cs = cs + run
            o_ref[:, lo:lo + seg] = cs.astype(o_ref.dtype)
            run = cs[:, seg - 1:seg]                     # prefix through this segment
        car_ref[...] = run

    channel_scan(t_ref, ot_ref, tcar_ref)
    channel_scan(e_ref, oe_ref, ecar_ref)


def masked_cumsum_2ch_pallas(times2d: jax.Array,
                             emb1_2d: jax.Array,
                             seq_lens: jax.Array):
    """Masked cumsum along the last axis for two (B, L) channels.

    Returns (cumsum_times, cumsum_emb1), each (B, L) float32.
    """
    B, L = times2d.shape
    times2d = times2d.astype(jnp.float32)
    emb1_2d = emb1_2d.astype(jnp.float32)
    seq_lens = seq_lens.astype(jnp.int32)

    # Rows: pad only up to the 8-sublane granule (no-op when B % 8 == 0).
    B_p = _round_up(B, 8)
    if B_p != B:
        times2d = jnp.pad(times2d, ((0, B_p - B), (0, 0)))
        emb1_2d = jnp.pad(emb1_2d, ((0, B_p - B), (0, 0)))
        seq_lens = jnp.pad(seq_lens, (0, B_p - B))       # len 0 => fully masked
    lens = seq_lens.reshape(B_p, 1)

    # Lane tile (L is NOT padded; the last block may be partial & masked).
    tl = _pick_tl(L)
    # Row tile: large blocks, but >= 2 row blocks when B permits (v7x megacore).
    tr = B_p if B_p <= 8 else min(512, max(8, _round_up(B_p // 2, 8)))

    tri = jnp.triu(jnp.ones((_SEG, _SEG), jnp.float32))  # resident constant

    grid = (pl.cdiv(B_p, tr), pl.cdiv(L, tl))

    out_t, out_e = pl.pallas_call(
        _masked_cumsum2_kernel,
        out_shape=(jax.ShapeDtypeStruct((B_p, L), jnp.float32),
                   jax.ShapeDtypeStruct((B_p, L), jnp.float32)),
        grid_spec=pltpu.PrefetchScalarGridSpec(
            num_scalar_prefetch=0,
            grid=grid,                                   # rows parallel, L last
            in_specs=[
                pl.BlockSpec((tr, 1), lambda i, j: (i, 0)),       # seq lens
                pl.BlockSpec((_SEG, _SEG), lambda i, j: (0, 0)),  # tri (resident)
                pl.BlockSpec((tr, tl), lambda i, j: (i, j)),      # times block
                pl.BlockSpec((tr, tl), lambda i, j: (i, j)),      # emb1 block
            ],
            out_specs=[
                pl.BlockSpec((tr, tl), lambda i, j: (i, j)),
                pl.BlockSpec((tr, tl), lambda i, j: (i, j)),
            ],
            scratch_shapes=[
                pltpu.VMEM((tr, 1), jnp.float32),        # times carry
                pltpu.VMEM((tr, 1), jnp.float32),        # emb carry
            ],
        ),
        compiler_params=pltpu.CompilerParams(
            dimension_semantics=("parallel", "arbitrary"),
            vmem_limit_bytes=32 << 20,
        ),
    )(lens, tri, times2d, emb1_2d)

    if B_p != B:
        out_t = out_t[:B]
        out_e = out_e[:B]
    return out_t, out_e


@jax.jit
def cumsum_model_forward(embeddings: jax.Array,
                         times: jax.Array,
                         seq_lens: jax.Array):
    """JAX/Pallas equivalent of CumSumModel.forward (return_states=False).

    Args:
        embeddings: (B, L, D) float payload.
        times:      (B, L)    float absolute timestamps.
        seq_lens:   (B,)      int   valid lengths.

    Returns:
        (outputs, None) with outputs of shape (B, L, 2):
        channel 0 = cumsum(times * mask), channel 1 = cumsum(emb[..., 1] * mask).
    """
    emb1 = embeddings[..., 1]                            # (B, L) channel extraction
    out_t, out_e = masked_cumsum_2ch_pallas(times, emb1, seq_lens)
    outputs = jnp.stack([out_t, out_e], axis=-1)         # (B, L, 2)
    states = None  # TODO(synk): return_states='full' (TransformerState) path not implemented.
    return outputs, states


def _reference(embeddings, times, seq_lens):
    L = times.shape[1]
    stacked = jnp.stack([times, embeddings[..., 1]], axis=-1)
    mask = (jnp.arange(L)[None, :] < seq_lens[:, None]).astype(stacked.dtype)
    return jnp.cumsum(stacked * mask[..., None], axis=1)


if __name__ == "__main__":
    key = jax.random.PRNGKey(0)

    # Small shape matching the module's test setup (B=2, L=8, D=32).
    B, L, D = 2, 8, 32
    k1, k2 = jax.random.split(key)
    embeddings = jax.random.normal(k1, (B, L, D), dtype=jnp.float32)
    times = jnp.cumsum(
        jnp.abs(jax.random.normal(k2, (B, L), dtype=jnp.float32)), axis=1)
    seq_lens = jnp.array([8, 5], dtype=jnp.int32)

    outputs, states = cumsum_model_forward(embeddings, times, seq_lens)
    outputs = jax.block_until_ready(outputs)
    ref = _reference(embeddings, times, seq_lens)
    assert outputs.shape == (B, L, 2)
    assert states is None
    assert jnp.allclose(outputs, ref, rtol=1e-5, atol=1e-4), \
        float(jnp.max(jnp.abs(outputs - ref)))

    # Larger check exercising multi-block L carry, the segmented tri matmuls
    # and >= 2 parallel row blocks.
    B2, L2, D2 = 16, 1024, 32
    k3, k4, k5 = jax.random.split(key, 3)
    embeddings2 = jax.random.normal(k3, (B2, L2, D2), dtype=jnp.float32)
    times2 = jnp.cumsum(
        jnp.abs(jax.random.normal(k4, (B2, L2), dtype=jnp.float32)), axis=1)
    seq_lens2 = jax.random.randint(k5, (B2,), 1, L2 + 1, dtype=jnp.int32)

    outputs2, _ = cumsum_model_forward(embeddings2, times2, seq_lens2)
    outputs2 = jax.block_until_ready(outputs2)
    ref2 = _reference(embeddings2, times2, seq_lens2)
    assert jnp.allclose(outputs2, ref2, rtol=1e-5, atol=2e-3), \
        float(jnp.max(jnp.abs(outputs2 - ref2)))

    print("KERNEL_OK")
</pallas_src>

<mosaic_0001>
module attributes {stable_mosaic.version = 11 : i64} {
  func.func @_masked_cumsum2_kernel(%arg0: i32, %arg1: i32, %arg2: memref<8x1xi32, #tpu.memory_space<vmem>>, %arg3: memref<128x128xf32, #tpu.memory_space<vmem>>, %arg4: memref<8x128xf32, #tpu.memory_space<vmem>>, %arg5: memref<8x128xf32, #tpu.memory_space<vmem>>, %arg6: memref<8x128xf32, #tpu.memory_space<vmem>>, %arg7: memref<8x128xf32, #tpu.memory_space<vmem>>, %arg8: memref<8x1xf32, #tpu.memory_space<vmem>>, %arg9: memref<8x1xf32, #tpu.memory_space<vmem>>) attributes {dimension_semantics = [#tpu.dimension_semantics<parallel>, #tpu.dimension_semantics<arbitrary>], iteration_bounds = array<i64: 1, 1>, scalar_prefetch = 0 : i64, scratch_operands = 2 : i64, tpu.core_type = #tpu.core_type<tc>, window_params = [{transform_indices = @transform_0, window_bounds = array<i64: 8, 1>}, {pipeline_mode = #tpu.pipeline_mode<synchronous>, transform_indices = @transform_1, window_bounds = array<i64: 128, 128>}, {transform_indices = @transform_2, window_bounds = array<i64: 8, 128>}, {transform_indices = @transform_3, window_bounds = array<i64: 8, 128>}, {transform_indices = @transform_4, window_bounds = array<i64: 8, 128>}, {transform_indices = @transform_5, window_bounds = array<i64: 8, 128>}]} {
    %c0_i32 = arith.constant 0 : i32
    %0 = arith.cmpi eq, %arg1, %c0_i32 : i32
    %1 = arith.extui %0 : i1 to i32
    %c0_i32_0 = arith.constant 0 : i32
    %2 = arith.cmpi ne, %1, %c0_i32_0 : i32
    scf.if %2 {
      %cst_23 = arith.constant 0.000000e+00 : f32
      %32 = vector.broadcast %cst_23 : f32 to vector<8x1xf32>
      %c0_24 = arith.constant 0 : index
      %c0_25 = arith.constant 0 : index
      %33 = vector.load %arg8[%c0_24, %c0_25] : memref<8x1xf32, #tpu.memory_space<vmem>>, vector<8x1xf32>
      tpu.vector_store %arg8[%c0_24, %c0_25], %32 {strides = array<i32>} : memref<8x1xf32, #tpu.memory_space<vmem>>, vector<8x1xf32>,
      %cst_26 = arith.constant 0.000000e+00 : f32
      %34 = vector.broadcast %cst_26 : f32 to vector<8x1xf32>
      %c0_27 = arith.constant 0 : index
      %c0_28 = arith.constant 0 : index
      %35 = vector.load %arg9[%c0_27, %c0_28] : memref<8x1xf32, #tpu.memory_space<vmem>>, vector<8x1xf32>
      tpu.vector_store %arg9[%c0_27, %c0_28], %34 {strides = array<i32>} : memref<8x1xf32, #tpu.memory_space<vmem>>, vector<8x1xf32>,
    } else {
    }
    %c128_i32 = arith.constant 128 : i32
    %3 = arith.muli %arg1, %c128_i32 : i32
    %4 = tpu.iota {dimensions = array<i32: 1>} : vector<1x128xi32>
    %5 = vector.broadcast %3 : i32 to vector<1x128xi32>
    %6 = arith.addi %5, %4 : vector<1x128xi32>
    %c0 = arith.constant 0 : index
    %c0_1 = arith.constant 0 : index
    %7 = vector.load %arg2[%c0, %c0_1] : memref<8x1xi32, #tpu.memory_space<vmem>>, vector<8x1xi32>
    %8 = vector.broadcast %6 : vector<1x128xi32> to vector<8x128xi32>
    %9 = vector.broadcast %7 : vector<8x1xi32> to vector<8x128xi32>
    %10 = arith.cmpi slt, %8, %9 : vector<8x128xi32>
    %c0_2 = arith.constant 0 : index
    %c0_3 = arith.constant 0 : index
    %11 = vector.load %arg3[%c0_2, %c0_3] : memref<128x128xf32, #tpu.memory_space<vmem>>, vector<128x128xf32>
    %c0_4 = arith.constant 0 : index
    %c0_5 = arith.constant 0 : index
    %12 = vector.load %arg4[%c0_4, %c0_5] : memref<8x128xf32, #tpu.memory_space<vmem>>, vector<8x128xf32>
    %cst = arith.constant 0.000000e+00 : f32
    %13 = vector.broadcast %cst : f32 to vector<8x128xf32>
    %14 = arith.select %10, %12, %13 : vector<8x128xi1>, vector<8x128xf32>
    %c0_6 = arith.constant 0 : index
    %c0_7 = arith.constant 0 : index
    %15 = vector.load %arg8[%c0_6, %c0_7] : memref<8x1xf32, #tpu.memory_space<vmem>>, vector<8x1xf32>
    %cst_8 = arith.constant dense<0.000000e+00> : vector<8x128xf32>
    %16 = tpu.matmul %14, %11, %cst_8 {dimension_numbers = #tpu.dot_dimension_numbers<[1], [0], [0], [1], [0, 0, 1, 1], [], []>, precision = #tpu.contract_precision<fp32>} : vector<8x128xf32>, vector<128x128xf32>, vector<8x128xf32> -> vector<8x128xf32>
    %17 = vector.broadcast %15 : vector<8x1xf32> to vector<8x128xf32>
    %18 = arith.addf %16, %17 : vector<8x128xf32>
    %c0_9 = arith.constant 0 : index
    %c0_10 = arith.constant 0 : index
    %19 = vector.load %arg6[%c0_9, %c0_10] : memref<8x128xf32, #tpu.memory_space<vmem>>, vector<8x128xf32>
    tpu.vector_store %arg6[%c0_9, %c0_10], %18 {strides = array<i32>} : memref<8x128xf32, #tpu.memory_space<vmem>>, vector<8x128xf32>,
    %20 = vector.extract_strided_slice %18 {offsets = [0, 127], sizes = [8, 1], strides = [1, 1]} : vector<8x128xf32> to vector<8x1xf32>
    %c0_11 = arith.constant 0 : index
    %c0_12 = arith.constant 0 : index
    %21 = vector.load %arg8[%c0_11, %c0_12] : memref<8x1xf32, #tpu.memory_space<vmem>>, vector<8x1xf32>
    tpu.vector_store %arg8[%c0_11, %c0_12], %20 {strides = array<i32>} : memref<8x1xf32, #tpu.memory_space<vmem>>, vector<8x1xf32>,
    %c0_13 = arith.constant 0 : index
    %c0_14 = arith.constant 0 : index
    %22 = vector.load %arg5[%c0_13, %c0_14] : memref<8x128xf32, #tpu.memory_space<vmem>>, vector<8x128xf32>
    %cst_15 = arith.constant 0.000000e+00 : f32
    %23 = vector.broadcast %cst_15 : f32 to vector<8x128xf32>
    %24 = arith.select %10, %22, %23 : vector<8x128xi1>, vector<8x128xf32>
    %c0_16 = arith.constant 0 : index
    %c0_17 = arith.constant 0 : index
    %25 = vector.load %arg9[%c0_16, %c0_17] : memref<8x1xf32, #tpu.memory_space<vmem>>, vector<8x1xf32>
    %cst_18 = arith.constant dense<0.000000e+00> : vector<8x128xf32>
    %26 = tpu.matmul %24, %11, %cst_18 {dimension_numbers = #tpu.dot_dimension_numbers<[1], [0], [0], [1], [0, 0, 1, 1], [], []>, precision = #tpu.contract_precision<fp32>} : vector<8x128xf32>, vector<128x128xf32>, vector<8x128xf32> -> vector<8x128xf32>
    %27 = vector.broadcast %25 : vector<8x1xf32> to vector<8x128xf32>
    %28 = arith.addf %26, %27 : vector<8x128xf32>
    %c0_19 = arith.constant 0 : index
    %c0_20 = arith.constant 0 : index
    %29 = vector.load %arg7[%c0_19, %c0_20] : memref<8x128xf32, #tpu.memory_space<vmem>>, vector<8x128xf32>
    tpu.vector_store %arg7[%c0_19, %c0_20], %28 {strides = array<i32>} : memref<8x128xf32, #tpu.memory_space<vmem>>, vector<8x128xf32>,
    %30 = vector.extract_strided_slice %28 {offsets = [0, 127], sizes = [8, 1], strides = [1, 1]} : vector<8x128xf32> to vector<8x1xf32>
    %c0_21 = arith.constant 0 : index
    %c0_22 = arith.constant 0 : index
    %31 = vector.load %arg9[%c0_21, %c0_22] : memref<8x1xf32, #tpu.memory_space<vmem>>, vector<8x1xf32>
    tpu.vector_store %arg9[%c0_21, %c0_22], %30 {strides = array<i32>} : memref<8x1xf32, #tpu.memory_space<vmem>>, vector<8x1xf32>,
    return
  }
  func.func @transform_0(%arg0: i32, %arg1: i32) -> (i32, i32) {
    %c0_i32 = arith.constant 0 : i32
    %c0_i32_0 = arith.constant 0 : i32
    return %arg0, %c0_i32 : i32, i32
  }
  func.func @transform_1(%arg0: i32, %arg1: i32) -> (i32, i32) {
    %c0_i32 = arith.constant 0 : i32
    %c0_i32_0 = arith.constant 0 : i32
    %c0_i32_1 = arith.constant 0 : i32
    return %c0_i32, %c0_i32_0 : i32, i32
  }
  func.func @transform_2(%arg0: i32, %arg1: i32) -> (i32, i32) {
    %c0_i32 = arith.constant 0 : i32
    return %arg0, %arg1 : i32, i32
  }
  func.func @transform_3(%arg0: i32, %arg1: i32) -> (i32, i32) {
    %c0_i32 = arith.constant 0 : i32
    return %arg0, %arg1 : i32, i32
  }
  func.func @transform_4(%arg0: i32, %arg1: i32) -> (i32, i32) {
    %c0_i32 = arith.constant 0 : i32
    return %arg0, %arg1 : i32, i32
  }
  func.func @transform_5(%arg0: i32, %arg1: i32) -> (i32, i32) {
    %c0_i32 = arith.constant 0 : i32
    return %arg0, %arg1 : i32, i32
  }
}

</mosaic_0001>

<llo_original>
// kernel: cumsum_model_forward.1
$region0: #{cumsum_model_forward.1}
  #allocation0 [shape = 'u32[]', space=smem, size = 0x4, offset = 0x4, fixed_abs, tag = 'smem constant byte address 0x4 - core index']
  #allocation1 [shape = 'u32[144,128]{1,0:T(1,128)}', space=vmem, size = 0x12000, scoped, tag = 'internal scratch']
  #allocation2 [shape = 'f32[8,1]{1,0:T(8,128)}', space=vmem, size = 0x1000, scoped, tag = 'scratch operand']
  #allocation3 [shape = 'f32[8,1]{1,0:T(8,128)}', space=vmem, size = 0x1000, scoped, tag = 'scratch operand']
  %s0 = inlined_call_operand.vmem [shape: s32[8,1], index: 0, kind: input, shape index: {}]
  %s1 = inlined_call_operand.vmem [shape: f32[128,128], index: 1, kind: input, shape index: {}]
  %s2 = inlined_call_operand.vmem [shape: f32[8,8], index: 2, kind: input, shape index: {}]
  %s3 = inlined_call_operand.vmem [shape: f32[8,8], index: 3, kind: input, shape index: {}]
  %s4 = inlined_call_operand.vmem [shape: f32[8,8], index: 4, kind: output, shape index: {0}]
  %s5 = inlined_call_operand.vmem [shape: f32[8,8], index: 5, kind: output, shape index: {1}]
  %6 = xla_tuple %s4, %s5
  %s7 = sld [smem:[#allocation0]]
  $region38: #{cumsum_model_forward.1} parent=0
    _
  %s9 = ssub.s32 1, %s7
  %s10 = scalar_select 0, %s9, %s7
  // Predicated region
  $region2: #{cumsum_model_forward.1} parent=0 // pred_check
    _
  $region3: #{cumsum_model_forward.1} parent=0 // pred_check_branch
    %12 = sbr.rel (0) target = $region5
  $region4: #{cumsum_model_forward.1} parent=0 // pred_region
    _
  $region5: #{cumsum_model_forward.1} parent=0 // pred_fallthru
    _
  // Predicated region
  $region6: #{cumsum_model_forward.1} parent=0 // pred_check
    _
  $region7: #{cumsum_model_forward.1} parent=0 // pred_check_branch
    %14 = sbr.rel (0) target = $region9
  $region8: #{cumsum_model_forward.1} parent=0 // pred_region
    _
  $region9: #{cumsum_model_forward.1} parent=0 // pred_fallthru
    _
  // Predicated region
  $region10: #{cumsum_model_forward.1} parent=0 // pred_check
    _
  $region11: #{cumsum_model_forward.1} parent=0 // pred_check_branch
    %16 = sbr.rel (0) target = $region13
  $region12: #{cumsum_model_forward.1} parent=0 // pred_region
    _
  $region13: #{cumsum_model_forward.1} parent=0 // pred_fallthru
    _
  // Predicated region
  $region14: #{cumsum_model_forward.1} parent=0 // pred_check
    _
  $region15: #{cumsum_model_forward.1} parent=0 // pred_check_branch
    %18 = sbr.rel (0) target = $region17
  $region16: #{cumsum_model_forward.1} parent=0 // pred_region
    _
  $region17: #{cumsum_model_forward.1} parent=0 // pred_fallthru
    _
  %p19 = scmp.eq.s32.totalorder 0, 0
  // Predicated region
  $region18: #{cumsum_model_forward.1} parent=0 // pred_check
    %p20 = pneg %p19
  $region19: #{cumsum_model_forward.1} parent=0 // pred_check_branch
    %22 = sbr.rel (%p20) target = $region21
  $region20: #{cumsum_model_forward.1} parent=0 // pred_region
    %vm23 = vcmask 7168
    %24 = vst.msk [vmem:[#allocation2] sm:$0xff] %vm23, 0.0
    %25 = vst.msk [vmem:[#allocation3] sm:$0xff] %vm23, 0.0
  $region21: #{cumsum_model_forward.1} parent=0 // pred_fallthru
    _
  %s26 = smul.u32 0, 128
  %v27 = vlaneseq
  %v28 = vand.u32 %v27, 127
  %v29 = vstv %s26
  %v30 = vadd.s32 %v29, %v28
  %v31 = vld [vmem:[%s0] sm:$0xff]
  %32 = vset.pattern.permute.xlu0 0
  %33 = vperm.xlu0 %32, %v31
  %v34 = vpop.permute.xlu0 %33
  %vm35 = vcmp.lt.s32.totalorder %v30, %v34
  %v36 = vld [vmem:[%s1] sm:$0xff]
  %v37 = vld [vmem:[%s1 + $0x8] sm:$0xff]
  %v38 = vld [vmem:[%s1 + $0x10] sm:$0xff]
  %v39 = vld [vmem:[%s1 + $0x18] sm:$0xff]
  %v40 = vld [vmem:[%s1 + $0x20] sm:$0xff]
  %v41 = vld [vmem:[%s1 + $0x28] sm:$0xff]
  %v42 = vld [vmem:[%s1 + $0x30] sm:$0xff]
  %v43 = vld [vmem:[%s1 + $0x38] sm:$0xff]
  %v44 = vld [vmem:[%s1 + $0x40] sm:$0xff]
  %v45 = vld [vmem:[%s1 + $0x48] sm:$0xff]
  %v46 = vld [vmem:[%s1 + $0x50] sm:$0xff]
  %v47 = vld [vmem:[%s1 + $0x58] sm:$0xff]
  %v48 = vld [vmem:[%s1 + $0x60] sm:$0xff]
  %v49 = vld [vmem:[%s1 + $0x68] sm:$0xff]
  %v50 = vld [vmem:[%s1 + $0x70] sm:$0xff]
  %v51 = vld [vmem:[%s1 + $0x78] sm:$0xff]
  %v52 = vld [vmem:[%s2] sm:$0xff]
  %v53 = vsel %vm35, %v52, 0.0
  %v54 = vld [vmem:[#allocation2] sm:$0xff]
  %56 = vset.pattern.permute.xlu0 0
  %57 = vperm.xlu0 %56, %v54
  %v58 = vpop.permute.xlu0 %57
  %60 = vmatprep.subr.mxu0 0.0
  %v61 = vand.u32 %v36, 4294901760
  %62 = vmatpush1.msra.mxu0 %v61
  %63 = vmatprep.subr.mxu0 0.0
  %v64 = vand.u32 %v37, 4294901760
  %65 = vmatpush1.msra.mxu0 %v64
  %66 = vmatprep.subr.mxu0 0.0
  %v67 = vand.u32 %v38, 4294901760
  %68 = vmatpush1.msra.mxu0 %v67
  %69 = vmatprep.subr.mxu0 0.0
  %v70 = vand.u32 %v39, 4294901760
  %71 = vmatpush1.msra.mxu0 %v70
  %72 = vmatprep.subr.mxu0 0.0
  %v73 = vand.u32 %v40, 4294901760
  %74 = vmatpush1.msra.mxu0 %v73
  %75 = vmatprep.subr.mxu0 0.0
  %v76 = vand.u32 %v41, 4294901760
  %77 = vmatpush1.msra.mxu0 %v76
  %78 = vmatprep.subr.mxu0 0.0
  %v79 = vand.u32 %v42, 4294901760
  %80 = vmatpush1.msra.mxu0 %v79
  %81 = vmatprep.subr.mxu0 0.0
  %v82 = vand.u32 %v43, 4294901760
  %83 = vmatpush1.msra.mxu0 %v82
  %84 = vmatprep.subr.mxu0 0.0
  %v85 = vand.u32 %v44, 4294901760
  %86 = vmatpush1.msra.mxu0 %v85
  %87 = vmatprep.subr.mxu0 0.0
  %v88 = vand.u32 %v45, 4294901760
  %89 = vmatpush1.msra.mxu0 %v88
  %90 = vmatprep.subr.mxu0 0.0
  %v91 = vand.u32 %v46, 4294901760
  %92 = vmatpush1.msra.mxu0 %v91
  %93 = vmatprep.subr.mxu0 0.0
  %v94 = vand.u32 %v47, 4294901760
  %95 = vmatpush1.msra.mxu0 %v94
  %96 = vmatprep.subr.mxu0 0.0
  %v97 = vand.u32 %v48, 4294901760
  %98 = vmatpush1.msra.mxu0 %v97
  %99 = vmatprep.subr.mxu0 0.0
  %v100 = vand.u32 %v49, 4294901760
  %101 = vmatpush1.msra.mxu0 %v100
  %102 = vmatprep.subr.mxu0 0.0
  %v103 = vand.u32 %v50, 4294901760
  %104 = vmatpush1.msra.mxu0 %v103
  %105 = vmatprep.subr.mxu0 0.0
  %v106 = vand.u32 %v51, 4294901760
  %107 = vmatpush1.msra.mxu0 %v106
  %108 = vmatprep.subr.mxu0 0.0
  %109 = vmatpush1.msra.mxu0 0.0
  %110 = vmatprep.subr.mxu0 0.0
  %111 = vmatpush1.msra.mxu0 0.0
  %112 = vmatprep.subr.mxu0 0.0
  %113 = vmatpush1.msra.mxu0 0.0
  %114 = vmatprep.subr.mxu0 0.0
  %115 = vmatpush1.msra.mxu0 0.0
  %116 = vmatprep.subr.mxu0 0.0
  %117 = vmatpush1.msra.mxu0 0.0
  %118 = vmatprep.subr.mxu0 0.0
  %119 = vmatpush1.msra.mxu0 0.0
  %120 = vmatprep.subr.mxu0 0.0
  %121 = vmatpush1.msra.mxu0 0.0
  %122 = vmatprep.subr.mxu0 0.0
  %123 = vmatpush1.msra.mxu0 0.0
  %124 = vmatprep.subr.mxu0 0.0
  %125 = vmatpush1.msra.mxu0 0.0
  %126 = vmatprep.subr.mxu0 0.0
  %127 = vmatpush1.msra.mxu0 0.0
  %128 = vmatprep.subr.mxu0 0.0
  %129 = vmatpush1.msra.mxu0 0.0
  %130 = vmatprep.subr.mxu0 0.0
  %131 = vmatpush1.msra.mxu0 0.0
  %132 = vmatprep.subr.mxu0 0.0
  %133 = vmatpush1.msra.mxu0 0.0
  %134 = vmatprep.subr.mxu0 0.0
  %135 = vmatpush1.msra.mxu0 0.0
  %136 = vmatprep.subr.mxu0 0.0
  %137 = vmatpush1.msra.mxu0 0.0
  %138 = vmatprep.subr.mxu0 0.0
  %139 = vmatpush1.msra.mxu0 0.0
  %140 = vmatprep.mubr.f32.mxu0 0.0
  %v141 = vand.u32 %v53, 4294901760
  %v142 = vsub.f32 %v53, %v141
  %v143 = vand.u32 %v142, 4294901760
  %v144 = vsub.f32 %v142, %v143
  %v145 = vand.u32 %v144, 4294901760
  %146 = vmatmul.mubr.f32.gmra.mrb[0].mxu0 %v145
  %v147 = vpop.f32.mrb[0].mxu0
  %v148 = vadd.f32 %v58, %v147
  %v149 = vpop.f32.mrb[0].mxu0
  %150 = vdwg.mxu0
  %151 = vmatprep.subr.mxu0 0.0
  %v152 = vand.u32 %v36, 4294901760
  %v153 = vsub.f32 %v36, %v152
  %v154 = vand.u32 %v153, 4294901760
  %v155 = vsub.f32 %v153, %v154
  %v156 = vand.u32 %v155, 4294901760
  %157 = vmatpush1.msra.mxu0 %v156
  %158 = vmatprep.subr.mxu0 0.0
  %v159 = vand.u32 %v37, 4294901760
  %v160 = vsub.f32 %v37, %v159
  %v161 = vand.u32 %v160, 4294901760
  %v162 = vsub.f32 %v160, %v161
  %v163 = vand.u32 %v162, 4294901760
  %164 = vmatpush1.msra.mxu0 %v163
  %165 = vmatprep.subr.mxu0 0.0
  %v166 = vand.u32 %v38, 4294901760
  %v167 = vsub.f32 %v38, %v166
  %v168 = vand.u32 %v167, 4294901760
  %v169 = vsub.f32 %v167, %v168
  %v170 = vand.u32 %v169, 4294901760
  %171 = vmatpush1.msra.mxu0 %v170
  %172 = vmatprep.subr.mxu0 0.0
  %v173 = vand.u32 %v39, 4294901760
  %v174 = vsub.f32 %v39, %v173
  %v175 = vand.u32 %v174, 4294901760
  %v176 = vsub.f32 %v174, %v175
  %v177 = vand.u32 %v176, 4294901760
  %178 = vmatpush1.msra.mxu0 %v177
  %179 = vmatprep.subr.mxu0 0.0
  %v180 = vand.u32 %v40, 4294901760
  %v181 = vsub.f32 %v40, %v180
  %v182 = vand.u32 %v181, 4294901760
  %v183 = vsub.f32 %v181, %v182
  %v184 = vand.u32 %v183, 4294901760
  %185 = vmatpush1.msra.mxu0 %v184
  %186 = vmatprep.subr.mxu0 0.0
  %v187 = vand.u32 %v41, 4294901760
  %v188 = vsub.f32 %v41, %v187
  %v189 = vand.u32 %v188, 4294901760
  %v190 = vsub.f32 %v188, %v189
  %v191 = vand.u32 %v190, 4294901760
  %192 = vmatpush1.msra.mxu0 %v191
  %193 = vmatprep.subr.mxu0 0.0
  %v194 = vand.u32 %v42, 4294901760
  %v195 = vsub.f32 %v42, %v194
  %v196 = vand.u32 %v195, 4294901760
  %v197 = vsub.f32 %v195, %v196
  %v198 = vand.u32 %v197, 4294901760
  %199 = vmatpush1.msra.mxu0 %v198
  %200 = vmatprep.subr.mxu0 0.0
  %v201 = vand.u32 %v43, 4294901760
  %v202 = vsub.f32 %v43, %v201
  %v203 = vand.u32 %v202, 4294901760
  %v204 = vsub.f32 %v202, %v203
  %v205 = vand.u32 %v204, 4294901760
  %206 = vmatpush1.msra.mxu0 %v205
  %207 = vmatprep.subr.mxu0 0.0
  %v208 = vand.u32 %v44, 4294901760
  %v209 = vsub.f32 %v44, %v208
  %v210 = vand.u32 %v209, 4294901760
  %v211 = vsub.f32 %v209, %v210
  %v212 = vand.u32 %v211, 4294901760
  %213 = vmatpush1.msra.mxu0 %v212
  %214 = vmatprep.subr.mxu0 0.0
  %v215 = vand.u32 %v45, 4294901760
  %v216 = vsub.f32 %v45, %v215
  %v217 = vand.u32 %v216, 4294901760
  %v218 = vsub.f32 %v216, %v217
  %v219 = vand.u32 %v218, 4294901760
  %220 = vmatpush1.msra.mxu0 %v219
  %221 = vmatprep.subr.mxu0 0.0
  %v222 = vand.u32 %v46, 4294901760
  %v223 = vsub.f32 %v46, %v222
  %v224 = vand.u32 %v223, 4294901760
  %v225 = vsub.f32 %v223, %v224
  %v226 = vand.u32 %v225, 4294901760
  %227 = vmatpush1.msra.mxu0 %v226
  %228 = vmatprep.subr.mxu0 0.0
  %v229 = vand.u32 %v47, 4294901760
  %v230 = vsub.f32 %v47, %v229
  %v231 = vand.u32 %v230, 4294901760
  %v232 = vsub.f32 %v230, %v231
  %v233 = vand.u32 %v232, 4294901760
  %234 = vmatpush1.msra.mxu0 %v233
  %235 = vmatprep.subr.mxu0 0.0
  %v236 = vand.u32 %v48, 4294901760
  %v237 = vsub.f32 %v48, %v236
  %v238 = vand.u32 %v237, 4294901760
  %v239 = vsub.f32 %v237, %v238
  %v240 = vand.u32 %v239, 4294901760
  %241 = vmatpush1.msra.mxu0 %v240
  %242 = vmatprep.subr.mxu0 0.0
  %v243 = vand.u32 %v49, 4294901760
  %v244 = vsub.f32 %v49, %v243
  %v245 = vand.u32 %v244, 4294901760
  %v246 = vsub.f32 %v244, %v245
  %v247 = vand.u32 %v246, 4294901760
  %248 = vmatpush1.msra.mxu0 %v247
  %249 = vmatprep.subr.mxu0 0.0
  %v250 = vand.u32 %v50, 4294901760
  %v251 = vsub.f32 %v50, %v250
  %v252 = vand.u32 %v251, 4294901760
  %v253 = vsub.f32 %v251, %v252
  %v254 = vand.u32 %v253, 4294901760
  %255 = vmatpush1.msra.mxu0 %v254
  %256 = vmatprep.subr.mxu0 0.0
  %v257 = vand.u32 %v51, 4294901760
  %v258 = vsub.f32 %v51, %v257
  %v259 = vand.u32 %v258, 4294901760
  %v260 = vsub.f32 %v258, %v259
  %v261 = vand.u32 %v260, 4294901760
  %262 = vmatpush1.msra.mxu0 %v261
  %263 = vmatprep.subr.mxu0 0.0
  %264 = vmatpush1.msra.mxu0 0.0
  %265 = vmatprep.subr.mxu0 0.0
  %266 = vmatpush1.msra.mxu0 0.0
  %267 = vmatprep.subr.mxu0 0.0
  %268 = vmatpush1.msra.mxu0 0.0
  %269 = vmatprep.subr.mxu0 0.0
  %270 = vmatpush1.msra.mxu0 0.0
  %271 = vmatprep.subr.mxu0 0.0
  %272 = vmatpush1.msra.mxu0 0.0
  %273 = vmatprep.subr.mxu0 0.0
  %274 = vmatpush1.msra.mxu0 0.0
  %275 = vmatprep.subr.mxu0 0.0
  %276 = vmatpush1.msra.mxu0 0.0
  %277 = vmatprep.subr.mxu0 0.0
  %278 = vmatpush1.msra.mxu0 0.0
  %279 = vmatprep.subr.mxu0 0.0
  %280 = vmatpush1.msra.mxu0 0.0
  %281 = vmatprep.subr.mxu0 0.0
  %282 = vmatpush1.msra.mxu0 0.0
  %283 = vmatprep.subr.mxu0 0.0
  %284 = vmatpush1.msra.mxu0 0.0
  %285 = vmatprep.subr.mxu0 0.0
  %286 = vmatpush1.msra.mxu0 0.0
  %287 = vmatprep.subr.mxu0 0.0
  %288 = vmatpush1.msra.mxu0 0.0
  %289 = vmatprep.subr.mxu0 0.0
  %290 = vmatpush1.msra.mxu0 0.0
  %291 = vmatprep.subr.mxu0 0.0
  %292 = vmatpush1.msra.mxu0 0.0
  %293 = vmatprep.subr.mxu0 0.0
  %294 = vmatpush1.msra.mxu0 0.0
  %295 = vmatprep.mubr.f32.mxu0 0.0
  %v296 = vand.u32 %v53, 4294901760
  %297 = vmatmul.mubr.f32.gmra.mrb[0].mxu0 %v296
  %v298 = vpop.f32.mrb[0].mxu0
  %v299 = vadd.f32 %v148, %v298
  %v300 = vpop.f32.mrb[0].mxu0
  %301 = vdwg.mxu0
  %302 = vmatprep.subr.mxu0 0.0
  %v303 = vand.u32 %v36, 4294901760
  %v304 = vsub.f32 %v36, %v303
  %305 = vmatpush1.msra.mxu0 %v304
  %306 = vmatprep.subr.mxu0 0.0
  %v307 = vand.u32 %v37, 4294901760
  %v308 = vsub.f32 %v37, %v307
  %309 = vmatpush1.msra.mxu0 %v308
  %310 = vmatprep.subr.mxu0 0.0
  %v311 = vand.u32 %v38, 4294901760
  %v312 = vsub.f32 %v38, %v311
  %313 = vmatpush1.msra.mxu0 %v312
  %314 = vmatprep.subr.mxu0 0.0
  %v315 = vand.u32 %v39, 4294901760
  %v316 = vsub.f32 %v39, %v315
  %317 = vmatpush1.msra.mxu0 %v316
  %318 = vmatprep.subr.mxu0 0.0
  %v319 = vand.u32 %v40, 4294901760
  %v320 = vsub.f32 %v40, %v319
  %321 = vmatpush1.msra.mxu0 %v320
  %322 = vmatprep.subr.mxu0 0.0
  %v323 = vand.u32 %v41, 4294901760
  %v324 = vsub.f32 %v41, %v323
  %325 = vmatpush1.msra.mxu0 %v324
  %326 = vmatprep.subr.mxu0 0.0
  %v327 = vand.u32 %v42, 4294901760
  %v328 = vsub.f32 %v42, %v327
  %329 = vmatpush1.msra.mxu0 %v328
  %330 = vmatprep.subr.mxu0 0.0
  %v331 = vand.u32 %v43, 4294901760
  %v332 = vsub.f32 %v43, %v331
  %333 = vmatpush1.msra.mxu0 %v332
  %334 = vmatprep.subr.mxu0 0.0
  %v335 = vand.u32 %v44, 4294901760
  %v336 = vsub.f32 %v44, %v335
  %337 = vmatpush1.msra.mxu0 %v336
  %338 = vmatprep.subr.mxu0 0.0
  %v339 = vand.u32 %v45, 4294901760
  %v340 = vsub.f32 %v45, %v339
  %341 = vmatpush1.msra.mxu0 %v340
  %342 = vmatprep.subr.mxu0 0.0
  %v343 = vand.u32 %v46, 4294901760
  %v344 = vsub.f32 %v46, %v343
  %345 = vmatpush1.msra.mxu0 %v344
  %346 = vmatprep.subr.mxu0 0.0
  %v347 = vand.u32 %v47, 4294901760
  %v348 = vsub.f32 %v47, %v347
  %349 = vmatpush1.msra.mxu0 %v348
  %350 = vmatprep.subr.mxu0 0.0
  %v351 = vand.u32 %v48, 4294901760
  %v352 = vsub.f32 %v48, %v351
  %353 = vmatpush1.msra.mxu0 %v352
  %354 = vmatprep.subr.mxu0 0.0
  %v355 = vand.u32 %v49, 4294901760
  %v356 = vsub.f32 %v49, %v355
  %357 = vmatpush1.msra.mxu0 %v356
  %358 = vmatprep.subr.mxu0 0.0
  %v359 = vand.u32 %v50, 4294901760
  %v360 = vsub.f32 %v50, %v359
  %361 = vmatpush1.msra.mxu0 %v360
  %362 = vmatprep.subr.mxu0 0.0
  %v363 = vand.u32 %v51, 4294901760
  %v364 = vsub.f32 %v51, %v363
  %365 = vmatpush1.msra.mxu0 %v364
  %366 = vmatprep.subr.mxu0 0.0
  %367 = vmatpush1.msra.mxu0 0.0
  %368 = vmatprep.subr.mxu0 0.0
  %369 = vmatpush1.msra.mxu0 0.0
  %370 = vmatprep.subr.mxu0 0.0
  %371 = vmatpush1.msra.mxu0 0.0
  %372 = vmatprep.subr.mxu0 0.0
  %373 = vmatpush1.msra.mxu0 0.0
  %374 = vmatprep.subr.mxu0 0.0
  %375 = vmatpush1.msra.mxu0 0.0
  %376 = vmatprep.subr.mxu0 0.0
  %377 = vmatpush1.msra.mxu0 0.0
  %378 = vmatprep.subr.mxu0 0.0
  %379 = vmatpush1.msra.mxu0 0.0
  %380 = vmatprep.subr.mxu0 0.0
  %381 = vmatpush1.msra.mxu0 0.0
  %382 = vmatprep.subr.mxu0 0.0
  %383 = vmatpush1.msra.mxu0 0.0
  %384 = vmatprep.subr.mxu0 0.0
  %385 = vmatpush1.msra.mxu0 0.0
  %386 = vmatprep.subr.mxu0 0.0
  %387 = vmatpush1.msra.mxu0 0.0
  %388 = vmatprep.subr.mxu0 0.0
  %389 = vmatpush1.msra.mxu0 0.0
  %390 = vmatprep.subr.mxu0 0.0
  %391 = vmatpush1.msra.mxu0 0.0
  %392 = vmatprep.subr.mxu0 0.0
  %393 = vmatpush1.msra.mxu0 0.0
  %394 = vmatprep.subr.mxu0 0.0
  %395 = vmatpush1.msra.mxu0 0.0
  %396 = vmatprep.subr.mxu0 0.0
  %397 = vmatpush1.msra.mxu0 0.0
  %398 = vmatprep.mubr.f32.mxu0 0.0
  %v399 = vand.u32 %v53, 4294901760
  %v400 = vsub.f32 %v53, %v399
  %401 = vmatmul.mubr.f32.gmra.mrb[0].mxu0 %v400
  %v402 = vpop.f32.mrb[0].mxu0
  %v403 = vadd.f32 %v299, %v402
  %v404 = vpop.f32.mrb[0].mxu0
  %405 = vdwg.mxu0
  %406 = vmatprep.subr.mxu0 0.0
  %v407 = vand.u32 %v36, 4294901760
  %408 = vmatpush1.msra.mxu0 %v407
  %409 = vmatprep.subr.mxu0 0.0
  %v410 = vand.u32 %v37, 4294901760
  %411 = vmatpush1.msra.mxu0 %v410
  %412 = vmatprep.subr.mxu0 0.0
  %v413 = vand.u32 %v38, 4294901760
  %414 = vmatpush1.msra.mxu0 %v413
  %415 = vmatprep.subr.mxu0 0.0
  %v416 = vand.u32 %v39, 4294901760
  %417 = vmatpush1.msra.mxu0 %v416
  %418 = vmatprep.subr.mxu0 0.0
  %v419 = vand.u32 %v40, 4294901760
  %420 = vmatpush1.msra.mxu0 %v419
  %421 = vmatprep.subr.mxu0 0.0
  %v422 = vand.u32 %v41, 4294901760
  %423 = vmatpush1.msra.mxu0 %v422
  %424 = vmatprep.subr.mxu0 0.0
  %v425 = vand.u32 %v42, 4294901760
  %426 = vmatpush1.msra.mxu0 %v425
  %427 = vmatprep.subr.mxu0 0.0
  %v428 = vand.u32 %v43, 4294901760
  %429 = vmatpush1.msra.mxu0 %v428
  %430 = vmatprep.subr.mxu0 0.0
  %v431 = vand.u32 %v44, 4294901760
  %432 = vmatpush1.msra.mxu0 %v431
  %433 = vmatprep.subr.mxu0 0.0
  %v434 = vand.u32 %v45, 4294901760
  %435 = vmatpush1.msra.mxu0 %v434
  %436 = vmatprep.subr.mxu0 0.0
  %v437 = vand.u32 %v46, 4294901760
  %438 = vmatpush1.msra.mxu0 %v437
  %439 = vmatprep.subr.mxu0 0.0
  %v440 = vand.u32 %v47, 4294901760
  %441 = vmatpush1.msra.mxu0 %v440
  %442 = vmatprep.subr.mxu0 0.0
  %v443 = vand.u32 %v48, 4294901760
  %444 = vmatpush1.msra.mxu0 %v443
  %445 = vmatprep.subr.mxu0 0.0
  %v446 = vand.u32 %v49, 4294901760
  %447 = vmatpush1.msra.mxu0 %v446
  %448 = vmatprep.subr.mxu0 0.0
  %v449 = vand.u32 %v50, 4294901760
  %450 = vmatpush1.msra.mxu0 %v449
  %451 = vmatprep.subr.mxu0 0.0
  %v452 = vand.u32 %v51, 4294901760
  %453 = vmatpush1.msra.mxu0 %v452
  %454 = vmatprep.subr.mxu0 0.0
  %455 = vmatpush1.msra.mxu0 0.0
  %456 = vmatprep.subr.mxu0 0.0
  %457 = vmatpush1.msra.mxu0 0.0
  %458 = vmatprep.subr.mxu0 0.0
  %459 = vmatpush1.msra.mxu0 0.0
  %460 = vmatprep.subr.mxu0 0.0
  %461 = vmatpush1.msra.mxu0 0.0
  %462 = vmatprep.subr.mxu0 0.0
  %463 = vmatpush1.msra.mxu0 0.0
  %464 = vmatprep.subr.mxu0 0.0
  %465 = vmatpush1.msra.mxu0 0.0
  %466 = vmatprep.subr.mxu0 0.0
  %467 = vmatpush1.msra.mxu0 0.0
  %468 = vmatprep.subr.mxu0 0.0
  %469 = vmatpush1.msra.mxu0 0.0
  %470 = vmatprep.subr.mxu0 0.0
  %471 = vmatpush1.msra.mxu0 0.0
  %472 = vmatprep.subr.mxu0 0.0
  %473 = vmatpush1.msra.mxu0 0.0
  %474 = vmatprep.subr.mxu0 0.0
  %475 = vmatpush1.msra.mxu0 0.0
  %476 = vmatprep.subr.mxu0 0.0
  %477 = vmatpush1.msra.mxu0 0.0
  %478 = vmatprep.subr.mxu0 0.0
  %479 = vmatpush1.msra.mxu0 0.0
  %480 = vmatprep.subr.mxu0 0.0
  %481 = vmatpush1.msra.mxu0 0.0
  %482 = vmatprep.subr.mxu0 0.0
  %483 = vmatpush1.msra.mxu0 0.0
  %484 = vmatprep.subr.mxu0 0.0
  %485 = vmatpush1.msra.mxu0 0.0
  %486 = vmatprep.mubr.f32.mxu0 0.0
  %v487 = vand.u32 %v53, 4294901760
  %v488 = vsub.f32 %v53, %v487
  %v489 = vand.u32 %v488, 4294901760
  %490 = vmatmul.mubr.f32.gmra.mrb[0].mxu0 %v489
  %v491 = vpop.f32.mrb[0].mxu0
  %v492 = vadd.f32 %v403, %v491
  %v493 = vpop.f32.mrb[0].mxu0
  %494 = vdwg.mxu0
  %495 = vmatprep.subr.mxu0 0.0
  %v496 = vand.u32 %v36, 4294901760
  %v497 = vsub.f32 %v36, %v496
  %v498 = vand.u32 %v497, 4294901760
  %499 = vmatpush1.msra.mxu0 %v498
  %500 = vmatprep.subr.mxu0 0.0
  %v501 = vand.u32 %v37, 4294901760
  %v502 = vsub.f32 %v37, %v501
  %v503 = vand.u32 %v502, 4294901760
  %504 = vmatpush1.msra.mxu0 %v503
  %505 = vmatprep.subr.mxu0 0.0
  %v506 = vand.u32 %v38, 4294901760
  %v507 = vsub.f32 %v38, %v506
  %v508 = vand.u32 %v507, 4294901760
  %509 = vmatpush1.msra.mxu0 %v508
  %510 = vmatprep.subr.mxu0 0.0
  %v511 = vand.u32 %v39, 4294901760
  %v512 = vsub.f32 %v39, %v511
  %v513 = vand.u32 %v512, 4294901760
  %514 = vmatpush1.msra.mxu0 %v513
  %515 = vmatprep.subr.mxu0 0.0
  %v516 = vand.u32 %v40, 4294901760
  %v517 = vsub.f32 %v40, %v516
  %v518 = vand.u32 %v517, 4294901760
  %519 = vmatpush1.msra.mxu0 %v518
  %520 = vmatprep.subr.mxu0 0.0
  %v521 = vand.u32 %v41, 4294901760
  %v522 = vsub.f32 %v41, %v521
  %v523 = vand.u32 %v522, 4294901760
  %524 = vmatpush1.msra.mxu0 %v523
  %525 = vmatprep.subr.mxu0 0.0
  %v526 = vand.u32 %v42, 4294901760
  %v527 = vsub.f32 %v42, %v526
  %v528 = vand.u32 %v527, 4294901760
  %529 = vmatpush1.msra.mxu0 %v528
  %530 = vmatprep.subr.mxu0 0.0
  %v531 = vand.u32 %v43, 4294901760
  %v532 = vsub.f32 %v43, %v531
  %v533 = vand.u32 %v532, 4294901760
  %534 = vmatpush1.msra.mxu0 %v533
  %535 = vmatprep.subr.mxu0 0.0
  %v536 = vand.u32 %v44, 4294901760
  %v537 = vsub.f32 %v44, %v536
  %v538 = vand.u32 %v537, 4294901760
  %539 = vmatpush1.msra.mxu0 %v538
  %540 = vmatprep.subr.mxu0 0.0
  %v541 = vand.u32 %v45, 4294901760
  %v542 = vsub.f32 %v45, %v541
  %v543 = vand.u32 %v542, 4294901760
  %544 = vmatpush1.msra.mxu0 %v543
  %545 = vmatprep.subr.mxu0 0.0
  %v546 = vand.u32 %v46, 4294901760
  %v547 = vsub.f32 %v46, %v546
  %v548 = vand.u32 %v547, 4294901760
  %549 = vmatpush1.msra.mxu0 %v548
  %550 = vmatprep.subr.mxu0 0.0
  %v551 = vand.u32 %v47, 4294901760
  %v552 = vsub.f32 %v47, %v551
  %v553 = vand.u32 %v552, 4294901760
  %554 = vmatpush1.msra.mxu0 %v553
  %555 = vmatprep.subr.mxu0 0.0
  %v556 = vand.u32 %v48, 4294901760
  %v557 = vsub.f32 %v48, %v556
  %v558 = vand.u32 %v557, 4294901760
  %559 = vmatpush1.msra.mxu0 %v558
  %560 = vmatprep.subr.mxu0 0.0
  %v561 = vand.u32 %v49, 4294901760
  %v562 = vsub.f32 %v49, %v561
  %v563 = vand.u32 %v562, 4294901760
  %564 = vmatpush1.msra.mxu0 %v563
  %565 = vmatprep.subr.mxu0 0.0
  %v566 = vand.u32 %v50, 4294901760
  %v567 = vsub.f32 %v50, %v566
  %v568 = vand.u32 %v567, 4294901760
  %569 = vmatpush1.msra.mxu0 %v568
  %570 = vmatprep.subr.mxu0 0.0
  %v571 = vand.u32 %v51, 4294901760
  %v572 = vsub.f32 %v51, %v571
  %v573 = vand.u32 %v572, 4294901760
  %574 = vmatpush1.msra.mxu0 %v573
  %575 = vmatprep.subr.mxu0 0.0
  %576 = vmatpush1.msra.mxu0 0.0
  %577 = vmatprep.subr.mxu0 0.0
  %578 = vmatpush1.msra.mxu0 0.0
  %579 = vmatprep.subr.mxu0 0.0
  %580 = vmatpush1.msra.mxu0 0.0
  %581 = vmatprep.subr.mxu0 0.0
  %582 = vmatpush1.msra.mxu0 0.0
  %583 = vmatprep.subr.mxu0 0.0
  %584 = vmatpush1.msra.mxu0 0.0
  %585 = vmatprep.subr.mxu0 0.0
  %586 = vmatpush1.msra.mxu0 0.0
  %587 = vmatprep.subr.mxu0 0.0
  %588 = vmatpush1.msra.mxu0 0.0
  %589 = vmatprep.subr.mxu0 0.0
  %590 = vmatpush1.msra.mxu0 0.0
  %591 = vmatprep.subr.mxu0 0.0
  %592 = vmatpush1.msra.mxu0 0.0
  %593 = vmatprep.subr.mxu0 0.0
  %594 = vmatpush1.msra.mxu0 0.0
  %595 = vmatprep.subr.mxu0 0.0
  %596 = vmatpush1.msra.mxu0 0.0
  %597 = vmatprep.subr.mxu0 0.0
  %598 = vmatpush1.msra.mxu0 0.0
  %599 = vmatprep.subr.mxu0 0.0
  %600 = vmatpush1.msra.mxu0 0.0
  %601 = vmatprep.subr.mxu0 0.0
  %602 = vmatpush1.msra.mxu0 0.0
  %603 = vmatprep.subr.mxu0 0.0
  %604 = vmatpush1.msra.mxu0 0.0
  %605 = vmatprep.subr.mxu0 0.0
  %606 = vmatpush1.msra.mxu0 0.0
  %607 = vmatprep.mubr.f32.mxu0 0.0
  %v608 = vand.u32 %v53, 4294901760
  %609 = vmatmul.mubr.f32.gmra.mrb[0].mxu0 %v608
  %v610 = vpop.f32.mrb[0].mxu0
  %v611 = vadd.f32 %v492, %v610
  %v612 = vpop.f32.mrb[0].mxu0
  %613 = vdwg.mxu0
  %614 = vmatprep.subr.mxu0 0.0
  %v615 = vand.u32 %v36, 4294901760
  %616 = vmatpush1.msra.mxu0 %v615
  %617 = vmatprep.subr.mxu0 0.0
  %v618 = vand.u32 %v37, 4294901760
  %619 = vmatpush1.msra.mxu0 %v618
  %620 = vmatprep.subr.mxu0 0.0
  %v621 = vand.u32 %v38, 4294901760
  %622 = vmatpush1.msra.mxu0 %v621
  %623 = vmatprep.subr.mxu0 0.0
  %v624 = vand.u32 %v39, 4294901760
  %625 = vmatpush1.msra.mxu0 %v624
  %626 = vmatprep.subr.mxu0 0.0
  %v627 = vand.u32 %v40, 4294901760
  %628 = vmatpush1.msra.mxu0 %v627
  %629 = vmatprep.subr.mxu0 0.0
  %v630 = vand.u32 %v41, 4294901760
  %631 = vmatpush1.msra.mxu0 %v630
  %632 = vmatprep.subr.mxu0 0.0
  %v633 = vand.u32 %v42, 4294901760
  %634 = vmatpush1.msra.mxu0 %v633
  %635 = vmatprep.subr.mxu0 0.0
  %v636 = vand.u32 %v43, 4294901760
  %637 = vmatpush1.msra.mxu0 %v636
  %638 = vmatprep.subr.mxu0 0.0
  %v639 = vand.u32 %v44, 4294901760
  %640 = vmatpush1.msra.mxu0 %v639
  %641 = vmatprep.subr.mxu0 0.0
  %v642 = vand.u32 %v45, 4294901760
  %643 = vmatpush1.msra.mxu0 %v642
  %644 = vmatprep.subr.mxu0 0.0
  %v645 = vand.u32 %v46, 4294901760
  %646 = vmatpush1.msra.mxu0 %v645
  %647 = vmatprep.subr.mxu0 0.0
  %v648 = vand.u32 %v47, 4294901760
  %649 = vmatpush1.msra.mxu0 %v648
  %650 = vmatprep.subr.mxu0 0.0
  %v651 = vand.u32 %v48, 4294901760
  %652 = vmatpush1.msra.mxu0 %v651
  %653 = vmatprep.subr.mxu0 0.0
  %v654 = vand.u32 %v49, 4294901760
  %655 = vmatpush1.msra.mxu0 %v654
  %656 = vmatprep.subr.mxu0 0.0
  %v657 = vand.u32 %v50, 4294901760
  %658 = vmatpush1.msra.mxu0 %v657
  %659 = vmatprep.subr.mxu0 0.0
  %v660 = vand.u32 %v51, 4294901760
  %661 = vmatpush1.msra.mxu0 %v660
  %662 = vmatprep.subr.mxu0 0.0
  %663 = vmatpush1.msra.mxu0 0.0
  %664 = vmatprep.subr.mxu0 0.0
  %665 = vmatpush1.msra.mxu0 0.0
  %666 = vmatprep.subr.mxu0 0.0
  %667 = vmatpush1.msra.mxu0 0.0
  %668 = vmatprep.subr.mxu0 0.0
  %669 = vmatpush1.msra.mxu0 0.0
  %670 = vmatprep.subr.mxu0 0.0
  %671 = vmatpush1.msra.mxu0 0.0
  %672 = vmatprep.subr.mxu0 0.0
  %673 = vmatpush1.msra.mxu0 0.0
  %674 = vmatprep.subr.mxu0 0.0
  %675 = vmatpush1.msra.mxu0 0.0
  %676 = vmatprep.subr.mxu0 0.0
  %677 = vmatpush1.msra.mxu0 0.0
  %678 = vmatprep.subr.mxu0 0.0
  %679 = vmatpush1.msra.mxu0 0.0
  %680 = vmatprep.subr.mxu0 0.0
  %681 = vmatpush1.msra.mxu0 0.0
  %682 = vmatprep.subr.mxu0 0.0
  %683 = vmatpush1.msra.mxu0 0.0
  %684 = vmatprep.subr.mxu0 0.0
  %685 = vmatpush1.msra.mxu0 0.0
  %686 = vmatprep.subr.mxu0 0.0
  %687 = vmatpush1.msra.mxu0 0.0
  %688 = vmatprep.subr.mxu0 0.0
  %689 = vmatpush1.msra.mxu0 0.0
  %690 = vmatprep.subr.mxu0 0.0
  %691 = vmatpush1.msra.mxu0 0.0
  %692 = vmatprep.subr.mxu0 0.0
  %693 = vmatpush1.msra.mxu0 0.0
  %694 = vmatprep.mubr.f32.mxu0 0.0
  %v695 = vand.u32 %v53, 4294901760
  %696 = vmatmul.mubr.f32.gmra.mrb[0].mxu0 %v695
  %v697 = vpop.f32.mrb[0].mxu0
  %v698 = vadd.f32 %v611, %v697
  %v699 = vpop.f32.mrb[0].mxu0
  %700 = vdwg.mxu0
  %701 = vst [vmem:[%s4] sm:$0xff] %v698
  %703 = vrot.lane.b32.xlu0 %v698, 1
  %v704 = vpop.permute.xlu0 %703
  %vm706 = vcmask 7168
  %707 = vst.msk [vmem:[#allocation2] sm:$0xff] %vm706, %v704
  %v708 = vld [vmem:[%s3] sm:$0xff]
  %v709 = vsel %vm35, %v708, 0.0
  %v710 = vld [vmem:[#allocation3] sm:$0xff]
  %712 = vset.pattern.permute.xlu0 0
  %713 = vperm.xlu0 %712, %v710
  %v714 = vpop.permute.xlu0 %713
  %716 = vmatprep.subr.mxu0 0.0
  %v717 = vand.u32 %v36, 4294901760
  %718 = vmatpush1.msra.mxu0 %v717
  %719 = vmatprep.subr.mxu0 0.0
  %v720 = vand.u32 %v37, 4294901760
  %721 = vmatpush1.msra.mxu0 %v720
  %722 = vmatprep.subr.mxu0 0.0
  %v723 = vand.u32 %v38, 4294901760
  %724 = vmatpush1.msra.mxu0 %v723
  %725 = vmatprep.subr.mxu0 0.0
  %v726 = vand.u32 %v39, 4294901760
  %727 = vmatpush1.msra.mxu0 %v726
  %728 = vmatprep.subr.mxu0 0.0
  %v729 = vand.u32 %v40, 4294901760
  %730 = vmatpush1.msra.mxu0 %v729
  %731 = vmatprep.subr.mxu0 0.0
  %v732 = vand.u32 %v41, 4294901760
  %733 = vmatpush1.msra.mxu0 %v732
  %734 = vmatprep.subr.mxu0 0.0
  %v735 = vand.u32 %v42, 4294901760
  %736 = vmatpush1.msra.mxu0 %v735
  %737 = vmatprep.subr.mxu0 0.0
  %v738 = vand.u32 %v43, 4294901760
  %739 = vmatpush1.msra.mxu0 %v738
  %740 = vmatprep.subr.mxu0 0.0
  %v741 = vand.u32 %v44, 4294901760
  %742 = vmatpush1.msra.mxu0 %v741
  %743 = vmatprep.subr.mxu0 0.0
  %v744 = vand.u32 %v45, 4294901760
  %745 = vmatpush1.msra.mxu0 %v744
  %746 = vmatprep.subr.mxu0 0.0
  %v747 = vand.u32 %v46, 4294901760
  %748 = vmatpush1.msra.mxu0 %v747
  %749 = vmatprep.subr.mxu0 0.0
  %v750 = vand.u32 %v47, 4294901760
  %751 = vmatpush1.msra.mxu0 %v750
  %752 = vmatprep.subr.mxu0 0.0
  %v753 = vand.u32 %v48, 4294901760
  %754 = vmatpush1.msra.mxu0 %v753
  %755 = vmatprep.subr.mxu0 0.0
  %v756 = vand.u32 %v49, 4294901760
  %757 = vmatpush1.msra.mxu0 %v756
  %758 = vmatprep.subr.mxu0 0.0
  %v759 = vand.u32 %v50, 4294901760
  %760 = vmatpush1.msra.mxu0 %v759
  %761 = vmatprep.subr.mxu0 0.0
  %v762 = vand.u32 %v51, 4294901760
  %763 = vmatpush1.msra.mxu0 %v762
  %764 = vmatprep.subr.mxu0 0.0
  %765 = vmatpush1.msra.mxu0 0.0
  %766 = vmatprep.subr.mxu0 0.0
  %767 = vmatpush1.msra.mxu0 0.0
  %768 = vmatprep.subr.mxu0 0.0
  %769 = vmatpush1.msra.mxu0 0.0
  %770 = vmatprep.subr.mxu0 0.0
  %771 = vmatpush1.msra.mxu0 0.0
  %772 = vmatprep.subr.mxu0 0.0
  %773 = vmatpush1.msra.mxu0 0.0
  %774 = vmatprep.subr.mxu0 0.0
  %775 = vmatpush1.msra.mxu0 0.0
  %776 = vmatprep.subr.mxu0 0.0
  %777 = vmatpush1.msra.mxu0 0.0
  %778 = vmatprep.subr.mxu0 0.0
  %779 = vmatpush1.msra.mxu0 0.0
  %780 = vmatprep.subr.mxu0 0.0
  %781 = vmatpush1.msra.mxu0 0.0
  %782 = vmatprep.subr.mxu0 0.0
  %783 = vmatpush1.msra.mxu0 0.0
  %784 = vmatprep.subr.mxu0 0.0
  %785 = vmatpush1.msra.mxu0 0.0
  %786 = vmatprep.subr.mxu0 0.0
  %787 = vmatpush1.msra.mxu0 0.0
  %788 = vmatprep.subr.mxu0 0.0
  %789 = vmatpush1.msra.mxu0 0.0
  %790 = vmatprep.subr.mxu0 0.0
  %791 = vmatpush1.msra.mxu0 0.0
  %792 = vmatprep.subr.mxu0 0.0
  %793 = vmatpush1.msra.mxu0 0.0
  %794 = vmatprep.subr.mxu0 0.0
  %795 = vmatpush1.msra.mxu0 0.0
  %796 = vmatprep.mubr.f32.mxu0 0.0
  %v797 = vand.u32 %v709, 4294901760
  %v798 = vsub.f32 %v709, %v797
  %v799 = vand.u32 %v798, 4294901760
  %v800 = vsub.f32 %v798, %v799
  %v801 = vand.u32 %v800, 4294901760
  %802 = vmatmul.mubr.f32.gmra.mrb[0].mxu0 %v801
  %v803 = vpop.f32.mrb[0].mxu0
  %v804 = vadd.f32 %v714, %v803
  %v805 = vpop.f32.mrb[0].mxu0
  %806 = vdwg.mxu0
  %807 = vmatprep.subr.mxu0 0.0
  %v808 = vand.u32 %v36, 4294901760
  %v809 = vsub.f32 %v36, %v808
  %v810 = vand.u32 %v809, 4294901760
  %v811 = vsub.f32 %v809, %v810
  %v812 = vand.u32 %v811, 4294901760
  %813 = vmatpush1.msra.mxu0 %v812
  %814 = vmatprep.subr.mxu0 0.0
  %v815 = vand.u32 %v37, 4294901760
  %v816 = vsub.f32 %v37, %v815
  %v817 = vand.u32 %v816, 4294901760
  %v818 = vsub.f32 %v816, %v817
  %v819 = vand.u32 %v818, 4294901760
  %820 = vmatpush1.msra.mxu0 %v819
  %821 = vmatprep.subr.mxu0 0.0
  %v822 = vand.u32 %v38, 4294901760
  %v823 = vsub.f32 %v38, %v822
  %v824 = vand.u32 %v823, 4294901760
  %v825 = vsub.f32 %v823, %v824
  %v826 = vand.u32 %v825, 4294901760
  %827 = vmatpush1.msra.mxu0 %v826
  %828 = vmatprep.subr.mxu0 0.0
  %v829 = vand.u32 %v39, 4294901760
  %v830 = vsub.f32 %v39, %v829
  %v831 = vand.u32 %v830, 4294901760
  %v832 = vsub.f32 %v830, %v831
  %v833 = vand.u32 %v832, 4294901760
  %834 = vmatpush1.msra.mxu0 %v833
  %835 = vmatprep.subr.mxu0 0.0
  %v836 = vand.u32 %v40, 4294901760
  %v837 = vsub.f32 %v40, %v836
  %v838 = vand.u32 %v837, 4294901760
  %v839 = vsub.f32 %v837, %v838
  %v840 = vand.u32 %v839, 4294901760
  %841 = vmatpush1.msra.mxu0 %v840
  %842 = vmatprep.subr.mxu0 0.0
  %v843 = vand.u32 %v41, 4294901760
  %v844 = vsub.f32 %v41, %v843
  %v845 = vand.u32 %v844, 4294901760
  %v846 = vsub.f32 %v844, %v845
  %v847 = vand.u32 %v846, 4294901760
  %848 = vmatpush1.msra.mxu0 %v847
  %849 = vmatprep.subr.mxu0 0.0
  %v850 = vand.u32 %v42, 4294901760
  %v851 = vsub.f32 %v42, %v850
  %v852 = vand.u32 %v851, 4294901760
  %v853 = vsub.f32 %v851, %v852
  %v854 = vand.u32 %v853, 4294901760
  %855 = vmatpush1.msra.mxu0 %v854
  %856 = vmatprep.subr.mxu0 0.0
  %v857 = vand.u32 %v43, 4294901760
  %v858 = vsub.f32 %v43, %v857
  %v859 = vand.u32 %v858, 4294901760
  %v860 = vsub.f32 %v858, %v859
  %v861 = vand.u32 %v860, 4294901760
  %862 = vmatpush1.msra.mxu0 %v861
  %863 = vmatprep.subr.mxu0 0.0
  %v864 = vand.u32 %v44, 4294901760
  %v865 = vsub.f32 %v44, %v864
  %v866 = vand.u32 %v865, 4294901760
  %v867 = vsub.f32 %v865, %v866
  %v868 = vand.u32 %v867, 4294901760
  %869 = vmatpush1.msra.mxu0 %v868
  %870 = vmatprep.subr.mxu0 0.0
  %v871 = vand.u32 %v45, 4294901760
  %v872 = vsub.f32 %v45, %v871
  %v873 = vand.u32 %v872, 4294901760
  %v874 = vsub.f32 %v872, %v873
  %v875 = vand.u32 %v874, 4294901760
  %876 = vmatpush1.msra.mxu0 %v875
  %877 = vmatprep.subr.mxu0 0.0
  %v878 = vand.u32 %v46, 4294901760
  %v879 = vsub.f32 %v46, %v878
  %v880 = vand.u32 %v879, 4294901760
  %v881 = vsub.f32 %v879, %v880
  %v882 = vand.u32 %v881, 4294901760
  %883 = vmatpush1.msra.mxu0 %v882
  %884 = vmatprep.subr.mxu0 0.0
  %v885 = vand.u32 %v47, 4294901760
  %v886 = vsub.f32 %v47, %v885
  %v887 = vand.u32 %v886, 4294901760
  %v888 = vsub.f32 %v886, %v887
  %v889 = vand.u32 %v888, 4294901760
  %890 = vmatpush1.msra.mxu0 %v889
  %891 = vmatprep.subr.mxu0 0.0
  %v892 = vand.u32 %v48, 4294901760
  %v893 = vsub.f32 %v48, %v892
  %v894 = vand.u32 %v893, 4294901760
  %v895 = vsub.f32 %v893, %v894
  %v896 = vand.u32 %v895, 4294901760
  %897 = vmatpush1.msra.mxu0 %v896
  %898 = vmatprep.subr.mxu0 0.0
  %v899 = vand.u32 %v49, 4294901760
  %v900 = vsub.f32 %v49, %v899
  %v901 = vand.u32 %v900, 4294901760
  %v902 = vsub.f32 %v900, %v901
  %v903 = vand.u32 %v902, 4294901760
  %904 = vmatpush1.msra.mxu0 %v903
  %905 = vmatprep.subr.mxu0 0.0
  %v906 = vand.u32 %v50, 4294901760
  %v907 = vsub.f32 %v50, %v906
  %v908 = vand.u32 %v907, 4294901760
  %v909 = vsub.f32 %v907, %v908
  %v910 = vand.u32 %v909, 4294901760
  %911 = vmatpush1.msra.mxu0 %v910
  %912 = vmatprep.subr.mxu0 0.0
  %v913 = vand.u32 %v51, 4294901760
  %v914 = vsub.f32 %v51, %v913
  %v915 = vand.u32 %v914, 4294901760
  %v916 = vsub.f32 %v914, %v915
  %v917 = vand.u32 %v916, 4294901760
  %918 = vmatpush1.msra.mxu0 %v917
  %919 = vmatprep.subr.mxu0 0.0
  %920 = vmatpush1.msra.mxu0 0.0
  %921 = vmatprep.subr.mxu0 0.0
  %922 = vmatpush1.msra.mxu0 0.0
  %923 = vmatprep.subr.mxu0 0.0
  %924 = vmatpush1.msra.mxu0 0.0
  %925 = vmatprep.subr.mxu0 0.0
  %926 = vmatpush1.msra.mxu0 0.0
  %927 = vmatprep.subr.mxu0 0.0
  %928 = vmatpush1.msra.mxu0 0.0
  %929 = vmatprep.subr.mxu0 0.0
  %930 = vmatpush1.msra.mxu0 0.0
  %931 = vmatprep.subr.mxu0 0.0
  %932 = vmatpush1.msra.mxu0 0.0
  %933 = vmatprep.subr.mxu0 0.0
  %934 = vmatpush1.msra.mxu0 0.0
  %935 = vmatprep.subr.mxu0 0.0
  %936 = vmatpush1.msra.mxu0 0.0
  %937 = vmatprep.subr.mxu0 0.0
  %938 = vmatpush1.msra.mxu0 0.0
  %939 = vmatprep.subr.mxu0 0.0
  %940 = vmatpush1.msra.mxu0 0.0
  %941 = vmatprep.subr.mxu0 0.0
  %942 = vmatpush1.msra.mxu0 0.0
  %943 = vmatprep.subr.mxu0 0.0
  %944 = vmatpush1.msra.mxu0 0.0
  %945 = vmatprep.subr.mxu0 0.0
  %946 = vmatpush1.msra.mxu0 0.0
  %947 = vmatprep.subr.mxu0 0.0
  %948 = vmatpush1.msra.mxu0 0.0
  %949 = vmatprep.subr.mxu0 0.0
  %950 = vmatpush1.msra.mxu0 0.0
  %951 = vmatprep.mubr.f32.mxu0 0.0
  %v952 = vand.u32 %v709, 4294901760
  %953 = vmatmul.mubr.f32.gmra.mrb[0].mxu0 %v952
  %v954 = vpop.f32.mrb[0].mxu0
  %v955 = vadd.f32 %v804, %v954
  %v956 = vpop.f32.mrb[0].mxu0
  %957 = vdwg.mxu0
  %958 = vmatprep.subr.mxu0 0.0
  %v959 = vand.u32 %v36, 4294901760
  %v960 = vsub.f32 %v36, %v959
  %961 = vmatpush1.msra.mxu0 %v960
  %962 = vmatprep.subr.mxu0 0.0
  %v963 = vand.u32 %v37, 4294901760
  %v964 = vsub.f32 %v37, %v963
  %965 = vmatpush1.msra.mxu0 %v964
  %966 = vmatprep.subr.mxu0 0.0
  %v967 = vand.u32 %v38, 4294901760
  %v968 = vsub.f32 %v38, %v967
  %969 = vmatpush1.msra.mxu0 %v968
  %970 = vmatprep.subr.mxu0 0.0
  %v971 = vand.u32 %v39, 4294901760
  %v972 = vsub.f32 %v39, %v971
  %973 = vmatpush1.msra.mxu0 %v972
  %974 = vmatprep.subr.mxu0 0.0
  %v975 = vand.u32 %v40, 4294901760
  %v976 = vsub.f32 %v40, %v975
  %977 = vmatpush1.msra.mxu0 %v976
  %978 = vmatprep.subr.mxu0 0.0
  %v979 = vand.u32 %v41, 4294901760
  %v980 = vsub.f32 %v41, %v979
  %981 = vmatpush1.msra.mxu0 %v980
  %982 = vmatprep.subr.mxu0 0.0
  %v983 = vand.u32 %v42, 4294901760
  %v984 = vsub.f32 %v42, %v983
  %985 = vmatpush1.msra.mxu0 %v984
  %986 = vmatprep.subr.mxu0 0.0
  %v987 = vand.u32 %v43, 4294901760
  %v988 = vsub.f32 %v43, %v987
  %989 = vmatpush1.msra.mxu0 %v988
  %990 = vmatprep.subr.mxu0 0.0
  %v991 = vand.u32 %v44, 4294901760
  %v992 = vsub.f32 %v44, %v991
  %993 = vmatpush1.msra.mxu0 %v992
  %994 = vmatprep.subr.mxu0 0.0
  %v995 = vand.u32 %v45, 4294901760
  %v996 = vsub.f32 %v45, %v995
  %997 = vmatpush1.msra.mxu0 %v996
  %998 = vmatprep.subr.mxu0 0.0
  %v999 = vand.u32 %v46, 4294901760
  %v1000 = vsub.f32 %v46, %v999
  %1001 = vmatpush1.msra.mxu0 %v1000
  %1002 = vmatprep.subr.mxu0 0.0
  %v1003 = vand.u32 %v47, 4294901760
  %v1004 = vsub.f32 %v47, %v1003
  %1005 = vmatpush1.msra.mxu0 %v1004
  %1006 = vmatprep.subr.mxu0 0.0
  %v1007 = vand.u32 %v48, 4294901760
  %v1008 = vsub.f32 %v48, %v1007
  %1009 = vmatpush1.msra.mxu0 %v1008
  %1010 = vmatprep.subr.mxu0 0.0
  %v1011 = vand.u32 %v49, 4294901760
  %v1012 = vsub.f32 %v49, %v1011
  %1013 = vmatpush1.msra.mxu0 %v1012
  %1014 = vmatprep.subr.mxu0 0.0
  %v1015 = vand.u32 %v50, 4294901760
  %v1016 = vsub.f32 %v50, %v1015
  %1017 = vmatpush1.msra.mxu0 %v1016
  %1018 = vmatprep.subr.mxu0 0.0
  %v1019 = vand.u32 %v51, 4294901760
  %v1020 = vsub.f32 %v51, %v1019
  %1021 = vmatpush1.msra.mxu0 %v1020
  %1022 = vmatprep.subr.mxu0 0.0
  %1023 = vmatpush1.msra.mxu0 0.0
  %1024 = vmatprep.subr.mxu0 0.0
  %1025 = vmatpush1.msra.mxu0 0.0
  %1026 = vmatprep.subr.mxu0 0.0
  %1027 = vmatpush1.msra.mxu0 0.0
  %1028 = vmatprep.subr.mxu0 0.0
  %1029 = vmatpush1.msra.mxu0 0.0
  %1030 = vmatprep.subr.mxu0 0.0
  %1031 = vmatpush1.msra.mxu0 0.0
  %1032 = vmatprep.subr.mxu0 0.0
  %1033 = vmatpush1.msra.mxu0 0.0
  %1034 = vmatprep.subr.mxu0 0.0
  %1035 = vmatpush1.msra.mxu0 0.0
  %1036 = vmatprep.subr.mxu0 0.0
  %1037 = vmatpush1.msra.mxu0 0.0
  %1038 = vmatprep.subr.mxu0 0.0
  %1039 = vmatpush1.msra.mxu0 0.0
  %1040 = vmatprep.subr.mxu0 0.0
  %1041 = vmatpush1.msra.mxu0 0.0
  %1042 = vmatprep.subr.mxu0 0.0
  %1043 = vmatpush1.msra.mxu0 0.0
  %1044 = vmatprep.subr.mxu0 0.0
  %1045 = vmatpush1.msra.mxu0 0.0
  %1046 = vmatprep.subr.mxu0 0.0
  %1047 = vmatpush1.msra.mxu0 0.0
  %1048 = vmatprep.subr.mxu0 0.0
  %1049 = vmatpush1.msra.mxu0 0.0
  %1050 = vmatprep.subr.mxu0 0.0
  %1051 = vmatpush1.msra.mxu0 0.0
  %1052 = vmatprep.subr.mxu0 0.0
  %1053 = vmatpush1.msra.mxu0 0.0
  %1054 = vmatprep.mubr.f32.mxu0 0.0
  %v1055 = vand.u32 %v709, 4294901760
  %v1056 = vsub.f32 %v709, %v1055
  %1057 = vmatmul.mubr.f32.gmra.mrb[0].mxu0 %v1056
  %v1058 = vpop.f32.mrb[0].mxu0
  %v1059 = vadd.f32 %v955, %v1058
  %v1060 = vpop.f32.mrb[0].mxu0
  %1061 = vdwg.mxu0
  %1062 = vmatprep.subr.mxu0 0.0
  %v1063 = vand.u32 %v36, 4294901760
  %1064 = vmatpush1.msra.mxu0 %v1063
  %1065 = vmatprep.subr.mxu0 0.0
  %v1066 = vand.u32 %v37, 4294901760
  %1067 = vmatpush1.msra.mxu0 %v1066
  %1068 = vmatprep.subr.mxu0 0.0
  %v1069 = vand.u32 %v38, 4294901760
  %1070 = vmatpush1.msra.mxu0 %v1069
  %1071 = vmatprep.subr.mxu0 0.0
  %v1072 = vand.u32 %v39, 4294901760
  %1073 = vmatpush1.msra.mxu0 %v1072
  %1074 = vmatprep.subr.mxu0 0.0
  %v1075 = vand.u32 %v40, 4294901760
  %1076 = vmatpush1.msra.mxu0 %v1075
  %1077 = vmatprep.subr.mxu0 0.0
  %v1078 = vand.u32 %v41, 4294901760
  %1079 = vmatpush1.msra.mxu0 %v1078
  %1080 = vmatprep.subr.mxu0 0.0
  %v1081 = vand.u32 %v42, 4294901760
  %1082 = vmatpush1.msra.mxu0 %v1081
  %1083 = vmatprep.subr.mxu0 0.0
  %v1084 = vand.u32 %v43, 4294901760
  %1085 = vmatpush1.msra.mxu0 %v1084
  %1086 = vmatprep.subr.mxu0 0.0
  %v1087 = vand.u32 %v44, 4294901760
  %1088 = vmatpush1.msra.mxu0 %v1087
  %1089 = vmatprep.subr.mxu0 0.0
  %v1090 = vand.u32 %v45, 4294901760
  %1091 = vmatpush1.msra.mxu0 %v1090
  %1092 = vmatprep.subr.mxu0 0.0
  %v1093 = vand.u32 %v46, 4294901760
  %1094 = vmatpush1.msra.mxu0 %v1093
  %1095 = vmatprep.subr.mxu0 0.0
  %v1096 = vand.u32 %v47, 4294901760
  %1097 = vmatpush1.msra.mxu0 %v1096
  %1098 = vmatprep.subr.mxu0 0.0
  %v1099 = vand.u32 %v48, 4294901760
  %1100 = vmatpush1.msra.mxu0 %v1099
  %1101 = vmatprep.subr.mxu0 0.0
  %v1102 = vand.u32 %v49, 4294901760
  %1103 = vmatpush1.msra.mxu0 %v1102
  %1104 = vmatprep.subr.mxu0 0.0
  %v1105 = vand.u32 %v50, 4294901760
  %1106 = vmatpush1.msra.mxu0 %v1105
  %1107 = vmatprep.subr.mxu0 0.0
  %v1108 = vand.u32 %v51, 4294901760
  %1109 = vmatpush1.msra.mxu0 %v1108
  %1110 = vmatprep.subr.mxu0 0.0
  %1111 = vmatpush1.msra.mxu0 0.0
  %1112 = vmatprep.subr.mxu0 0.0
  %1113 = vmatpush1.msra.mxu0 0.0
  %1114 = vmatprep.subr.mxu0 0.0
  %1115 = vmatpush1.msra.mxu0 0.0
  %1116 = vmatprep.subr.mxu0 0.0
  %1117 = vmatpush1.msra.mxu0 0.0
  %1118 = vmatprep.subr.mxu0 0.0
  %1119 = vmatpush1.msra.mxu0 0.0
  %1120 = vmatprep.subr.mxu0 0.0
  %1121 = vmatpush1.msra.mxu0 0.0
  %1122 = vmatprep.subr.mxu0 0.0
  %1123 = vmatpush1.msra.mxu0 0.0
  %1124 = vmatprep.subr.mxu0 0.0
  %1125 = vmatpush1.msra.mxu0 0.0
  %1126 = vmatprep.subr.mxu0 0.0
  %1127 = vmatpush1.msra.mxu0 0.0
  %1128 = vmatprep.subr.mxu0 0.0
  %1129 = vmatpush1.msra.mxu0 0.0
  %1130 = vmatprep.subr.mxu0 0.0
  %1131 = vmatpush1.msra.mxu0 0.0
  %1132 = vmatprep.subr.mxu0 0.0
  %1133 = vmatpush1.msra.mxu0 0.0
  %1134 = vmatprep.subr.mxu0 0.0
  %1135 = vmatpush1.msra.mxu0 0.0
  %1136 = vmatprep.subr.mxu0 0.0
  %1137 = vmatpush1.msra.mxu0 0.0
  %1138 = vmatprep.subr.mxu0 0.0
  %1139 = vmatpush1.msra.mxu0 0.0
  %1140 = vmatprep.subr.mxu0 0.0
  %1141 = vmatpush1.msra.mxu0 0.0
  %1142 = vmatprep.mubr.f32.mxu0 0.0
  %v1143 = vand.u32 %v709, 4294901760
  %v1144 = vsub.f32 %v709, %v1143
  %v1145 = vand.u32 %v1144, 4294901760
  %1146 = vmatmul.mubr.f32.gmra.mrb[0].mxu0 %v1145
  %v1147 = vpop.f32.mrb[0].mxu0
  %v1148 = vadd.f32 %v1059, %v1147
  %v1149 = vpop.f32.mrb[0].mxu0
  %1150 = vdwg.mxu0
  %1151 = vmatprep.subr.mxu0 0.0
  %v1152 = vand.u32 %v36, 4294901760
  %v1153 = vsub.f32 %v36, %v1152
  %v1154 = vand.u32 %v1153, 4294901760
  %1155 = vmatpush1.msra.mxu0 %v1154
  %1156 = vmatprep.subr.mxu0 0.0
  %v1157 = vand.u32 %v37, 4294901760
  %v1158 = vsub.f32 %v37, %v1157
  %v1159 = vand.u32 %v1158, 4294901760
  %1160 = vmatpush1.msra.mxu0 %v1159
  %1161 = vmatprep.subr.mxu0 0.0
  %v1162 = vand.u32 %v38, 4294901760
  %v1163 = vsub.f32 %v38, %v1162
  %v1164 = vand.u32 %v1163, 4294901760
  %1165 = vmatpush1.msra.mxu0 %v1164
  %1166 = vmatprep.subr.mxu0 0.0
  %v1167 = vand.u32 %v39, 4294901760
  %v1168 = vsub.f32 %v39, %v1167
  %v1169 = vand.u32 %v1168, 4294901760
  %1170 = vmatpush1.msra.mxu0 %v1169
  %1171 = vmatprep.subr.mxu0 0.0
  %v1172 = vand.u32 %v40, 4294901760
  %v1173 = vsub.f32 %v40, %v1172
  %v1174 = vand.u32 %v1173, 4294901760
  %1175 = vmatpush1.msra.mxu0 %v1174
  %1176 = vmatprep.subr.mxu0 0.0
  %v1177 = vand.u32 %v41, 4294901760
  %v1178 = vsub.f32 %v41, %v1177
  %v1179 = vand.u32 %v1178, 4294901760
  %1180 = vmatpush1.msra.mxu0 %v1179
  %1181 = vmatprep.subr.mxu0 0.0
  %v1182 = vand.u32 %v42, 4294901760
  %v1183 = vsub.f32 %v42, %v1182
  %v1184 = vand.u32 %v1183, 4294901760
  %1185 = vmatpush1.msra.mxu0 %v1184
  %1186 = vmatprep.subr.mxu0 0.0
  %v1187 = vand.u32 %v43, 4294901760
  %v1188 = vsub.f32 %v43, %v1187
  %v1189 = vand.u32 %v1188, 4294901760
  %1190 = vmatpush1.msra.mxu0 %v1189
  %1191 = vmatprep.subr.mxu0 0.0
  %v1192 = vand.u32 %v44, 4294901760
  %v1193 = vsub.f32 %v44, %v1192
  %v1194 = vand.u32 %v1193, 4294901760
  %1195 = vmatpush1.msra.mxu0 %v1194
  %1196 = vmatprep.subr.mxu0 0.0
  %v1197 = vand.u32 %v45, 4294901760
  %v1198 = vsub.f32 %v45, %v1197
  %v1199 = vand.u32 %v1198, 4294901760
  %1200 = vmatpush1.msra.mxu0 %v1199
  %1201 = vmatprep.subr.mxu0 0.0
  %v1202 = vand.u32 %v46, 4294901760
  %v1203 = vsub.f32 %v46, %v1202
  %v1204 = vand.u32 %v1203, 4294901760
  %1205 = vmatpush1.msra.mxu0 %v1204
  %1206 = vmatprep.subr.mxu0 0.0
  %v1207 = vand.u32 %v47, 4294901760
  %v1208 = vsub.f32 %v47, %v1207
  %v1209 = vand.u32 %v1208, 4294901760
  %1210 = vmatpush1.msra.mxu0 %v1209
  %1211 = vmatprep.subr.mxu0 0.0
  %v1212 = vand.u32 %v48, 4294901760
  %v1213 = vsub.f32 %v48, %v1212
  %v1214 = vand.u32 %v1213, 4294901760
  %1215 = vmatpush1.msra.mxu0 %v1214
  %1216 = vmatprep.subr.mxu0 0.0
  %v1217 = vand.u32 %v49, 4294901760
  %v1218 = vsub.f32 %v49, %v1217
  %v1219 = vand.u32 %v1218, 4294901760
  %1220 = vmatpush1.msra.mxu0 %v1219
  %1221 = vmatprep.subr.mxu0 0.0
  %v1222 = vand.u32 %v50, 4294901760
  %v1223 = vsub.f32 %v50, %v1222
  %v1224 = vand.u32 %v1223, 4294901760
  %1225 = vmatpush1.msra.mxu0 %v1224
  %1226 = vmatprep.subr.mxu0 0.0
  %v1227 = vand.u32 %v51, 4294901760
  %v1228 = vsub.f32 %v51, %v1227
  %v1229 = vand.u32 %v1228, 4294901760
  %1230 = vmatpush1.msra.mxu0 %v1229
  %1231 = vmatprep.subr.mxu0 0.0
  %1232 = vmatpush1.msra.mxu0 0.0
  %1233 = vmatprep.subr.mxu0 0.0
  %1234 = vmatpush1.msra.mxu0 0.0
  %1235 = vmatprep.subr.mxu0 0.0
  %1236 = vmatpush1.msra.mxu0 0.0
  %1237 = vmatprep.subr.mxu0 0.0
  %1238 = vmatpush1.msra.mxu0 0.0
  %1239 = vmatprep.subr.mxu0 0.0
  %1240 = vmatpush1.msra.mxu0 0.0
  %1241 = vmatprep.subr.mxu0 0.0
  %1242 = vmatpush1.msra.mxu0 0.0
  %1243 = vmatprep.subr.mxu0 0.0
  %1244 = vmatpush1.msra.mxu0 0.0
  %1245 = vmatprep.subr.mxu0 0.0
  %1246 = vmatpush1.msra.mxu0 0.0
  %1247 = vmatprep.subr.mxu0 0.0
  %1248 = vmatpush1.msra.mxu0 0.0
  %1249 = vmatprep.subr.mxu0 0.0
  %1250 = vmatpush1.msra.mxu0 0.0
  %1251 = vmatprep.subr.mxu0 0.0
  %1252 = vmatpush1.msra.mxu0 0.0
  %1253 = vmatprep.subr.mxu0 0.0
  %1254 = vmatpush1.msra.mxu0 0.0
  %1255 = vmatprep.subr.mxu0 0.0
  %1256 = vmatpush1.msra.mxu0 0.0
  %1257 = vmatprep.subr.mxu0 0.0
  %1258 = vmatpush1.msra.mxu0 0.0
  %1259 = vmatprep.subr.mxu0 0.0
  %1260 = vmatpush1.msra.mxu0 0.0
  %1261 = vmatprep.subr.mxu0 0.0
  %1262 = vmatpush1.msra.mxu0 0.0
  %1263 = vmatprep.mubr.f32.mxu0 0.0
  %v1264 = vand.u32 %v709, 4294901760
  %1265 = vmatmul.mubr.f32.gmra.mrb[0].mxu0 %v1264
  %v1266 = vpop.f32.mrb[0].mxu0
  %v1267 = vadd.f32 %v1148, %v1266
  %v1268 = vpop.f32.mrb[0].mxu0
  %1269 = vdwg.mxu0
  %1270 = vmatprep.subr.mxu0 0.0
  %v1271 = vand.u32 %v36, 4294901760
  %1272 = vmatpush1.msra.mxu0 %v1271
  %1273 = vmatprep.subr.mxu0 0.0
  %v1274 = vand.u32 %v37, 4294901760
  %1275 = vmatpush1.msra.mxu0 %v1274
  %1276 = vmatprep.subr.mxu0 0.0
  %v1277 = vand.u32 %v38, 4294901760
  %1278 = vmatpush1.msra.mxu0 %v1277
  %1279 = vmatprep.subr.mxu0 0.0
  %v1280 = vand.u32 %v39, 4294901760
  %1281 = vmatpush1.msra.mxu0 %v1280
  %1282 = vmatprep.subr.mxu0 0.0
  %v1283 = vand.u32 %v40, 4294901760
  %1284 = vmatpush1.msra.mxu0 %v1283
  %1285 = vmatprep.subr.mxu0 0.0
  %v1286 = vand.u32 %v41, 4294901760
  %1287 = vmatpush1.msra.mxu0 %v1286
  %1288 = vmatprep.subr.mxu0 0.0
  %v1289 = vand.u32 %v42, 4294901760
  %1290 = vmatpush1.msra.mxu0 %v1289
  %1291 = vmatprep.subr.mxu0 0.0
  %v1292 = vand.u32 %v43, 4294901760
  %1293 = vmatpush1.msra.mxu0 %v1292
  %1294 = vmatprep.subr.mxu0 0.0
  %v1295 = vand.u32 %v44, 4294901760
  %1296 = vmatpush1.msra.mxu0 %v1295
  %1297 = vmatprep.subr.mxu0 0.0
  %v1298 = vand.u32 %v45, 4294901760
  %1299 = vmatpush1.msra.mxu0 %v1298
  %1300 = vmatprep.subr.mxu0 0.0
  %v1301 = vand.u32 %v46, 4294901760
  %1302 = vmatpush1.msra.mxu0 %v1301
  %1303 = vmatprep.subr.mxu0 0.0
  %v1304 = vand.u32 %v47, 4294901760
  %1305 = vmatpush1.msra.mxu0 %v1304
  %1306 = vmatprep.subr.mxu0 0.0
  %v1307 = vand.u32 %v48, 4294901760
  %1308 = vmatpush1.msra.mxu0 %v1307
  %1309 = vmatprep.subr.mxu0 0.0
  %v1310 = vand.u32 %v49, 4294901760
  %1311 = vmatpush1.msra.mxu0 %v1310
  %1312 = vmatprep.subr.mxu0 0.0
  %v1313 = vand.u32 %v50, 4294901760
  %1314 = vmatpush1.msra.mxu0 %v1313
  %1315 = vmatprep.subr.mxu0 0.0
  %v1316 = vand.u32 %v51, 4294901760
  %1317 = vmatpush1.msra.mxu0 %v1316
  %1318 = vmatprep.subr.mxu0 0.0
  %1319 = vmatpush1.msra.mxu0 0.0
  %1320 = vmatprep.subr.mxu0 0.0
  %1321 = vmatpush1.msra.mxu0 0.0
  %1322 = vmatprep.subr.mxu0 0.0
  %1323 = vmatpush1.msra.mxu0 0.0
  %1324 = vmatprep.subr.mxu0 0.0
  %1325 = vmatpush1.msra.mxu0 0.0
  %1326 = vmatprep.subr.mxu0 0.0
  %1327 = vmatpush1.msra.mxu0 0.0
  %1328 = vmatprep.subr.mxu0 0.0
  %1329 = vmatpush1.msra.mxu0 0.0
  %1330 = vmatprep.subr.mxu0 0.0
  %1331 = vmatpush1.msra.mxu0 0.0
  %1332 = vmatprep.subr.mxu0 0.0
  %1333 = vmatpush1.msra.mxu0 0.0
  %1334 = vmatprep.subr.mxu0 0.0
  %1335 = vmatpush1.msra.mxu0 0.0
  %1336 = vmatprep.subr.mxu0 0.0
  %1337 = vmatpush1.msra.mxu0 0.0
  %1338 = vmatprep.subr.mxu0 0.0
  %1339 = vmatpush1.msra.mxu0 0.0
  %1340 = vmatprep.subr.mxu0 0.0
  %1341 = vmatpush1.msra.mxu0 0.0
  %1342 = vmatprep.subr.mxu0 0.0
  %1343 = vmatpush1.msra.mxu0 0.0
  %1344 = vmatprep.subr.mxu0 0.0
  %1345 = vmatpush1.msra.mxu0 0.0
  %1346 = vmatprep.subr.mxu0 0.0
  %1347 = vmatpush1.msra.mxu0 0.0
  %1348 = vmatprep.subr.mxu0 0.0
  %1349 = vmatpush1.msra.mxu0 0.0
  %1350 = vmatprep.mubr.f32.mxu0 0.0
  %v1351 = vand.u32 %v709, 4294901760
  %1352 = vmatmul.mubr.f32.gmra.mrb[0].mxu0 %v1351
  %v1353 = vpop.f32.mrb[0].mxu0
  %v1354 = vadd.f32 %v1267, %v1353
  %v1355 = vpop.f32.mrb[0].mxu0
  %1356 = vdwg.mxu0
  %1357 = vst [vmem:[%s5] sm:$0xff] %v1354
  %1359 = vrot.lane.b32.xlu0 %v1354, 1
  %v1360 = vpop.permute.xlu0 %1359
  %1362 = vst.msk [vmem:[#allocation3] sm:$0xff] %vm706, %v1360
  // Predicated region
  $region22: #{cumsum_model_forward.1} parent=0 // pred_check
    _
  $region23: #{cumsum_model_forward.1} parent=0 // pred_check_branch
    %1364 = sbr.rel (0) target = $region25
  $region24: #{cumsum_model_forward.1} parent=0 // pred_region
    _
  $region25: #{cumsum_model_forward.1} parent=0 // pred_fallthru
    _
  // Predicated region
  $region26: #{cumsum_model_forward.1} parent=0 // pred_check
    _
  $region27: #{cumsum_model_forward.1} parent=0 // pred_check_branch
    %1366 = sbr.rel (0) target = $region29
  $region28: #{cumsum_model_forward.1} parent=0 // pred_region
    _
  $region29: #{cumsum_model_forward.1} parent=0 // pred_fallthru
    _
  // Predicated region
  $region30: #{cumsum_model_forward.1} parent=0 // pred_check
    _
  $region31: #{cumsum_model_forward.1} parent=0 // pred_check_branch
    %1368 = sbr.rel (0) target = $region33
  $region32: #{cumsum_model_forward.1} parent=0 // pred_region
    _
  $region33: #{cumsum_model_forward.1} parent=0 // pred_fallthru
    _
  // Predicated region
  $region34: #{cumsum_model_forward.1} parent=0 // pred_check
    _
  $region35: #{cumsum_model_forward.1} parent=0 // pred_check_branch
    %1370 = sbr.rel (0) target = $region37
  $region36: #{cumsum_model_forward.1} parent=0 // pred_region
    _
  $region37: #{cumsum_model_forward.1} parent=0 // pred_fallthru
    _

</llo_original>
